<compile_context>
chip_gen: v6e
topology: v6e:2x2x1
jax: 0.10.0
libtpu: 0.0.40
codegen_flags: <defaults>
</compile_context>

<pallas_src>
import math
from functools import partial

import jax
import jax.numpy as jnp
from jax.experimental import pallas as pl
from jax.experimental.pallas import tpu as pltpu

LANE = 128          # lane width (last dim)
SUBLANE = 8         # f32 sublane multiple
MAX_ROW_TILE = 512  # row tile cap; <1 MiB/buffer even with 128-wide lanes


# ----------------------------- padding helpers -----------------------------
def _round_up(v, m):
    return ((v + m - 1) // m) * m


def _pad2(a, rows, cols):
    return jnp.pad(a, ((0, rows - a.shape[0]), (0, cols - a.shape[1])))


def _pad_cols(a, mult=LANE):
    return _pad2(a, a.shape[0], _round_up(a.shape[1], mult))


def _pad_rows_to(a, tile):
    return _pad2(a, _round_up(a.shape[0], tile), a.shape[1])


def _row_tile(n):
    return min(MAX_ROW_TILE, _round_up(max(n, 1), SUBLANE))


# ------------------ Kernel A: per-node projections --------------------------
# feat_q = lin_query(x);  Z = feat_q @ emb_label^T   (weights pre-transposed)
def _node_proj_kernel(x_ref, wq_t_ref, bq_ref, emb_t_ref, fq_ref, zq_ref):
    fq = jnp.dot(x_ref[...], wq_t_ref[...],
                 preferred_element_type=jnp.float32) + bq_ref[...]
    fq_ref[...] = fq
    zq_ref[...] = jnp.dot(fq, emb_t_ref[...], preferred_element_type=jnp.float32)


def node_proj(xp, wq_t, bq, emb_t):
    n = xp.shape[0]
    tile = _row_tile(n)
    xpp = _pad_rows_to(xp, tile)
    np_, Fp = xpp.shape
    Cp, Lp = wq_t.shape[1], emb_t.shape[1]
    fq, zq = pl.pallas_call(
        _node_proj_kernel,
        out_shape=(jax.ShapeDtypeStruct((np_, Cp), jnp.float32),
                   jax.ShapeDtypeStruct((np_, Lp), jnp.float32)),
        grid_spec=pltpu.PrefetchScalarGridSpec(
            num_scalar_prefetch=0,
            grid=(np_ // tile,),
            in_specs=[
                pl.BlockSpec((tile, Fp), lambda i: (i, 0)),
                pl.BlockSpec((Fp, Cp), lambda i: (0, 0)),
                pl.BlockSpec((1, Cp), lambda i: (0, 0)),
                pl.BlockSpec((Cp, Lp), lambda i: (0, 0)),
            ],
            out_specs=[
                pl.BlockSpec((tile, Cp), lambda i: (i, 0)),
                pl.BlockSpec((tile, Lp), lambda i: (i, 0)),
            ]),
        compiler_params=pltpu.CompilerParams(dimension_semantics=("parallel",)),
    )(xpp, wq_t, bq, emb_t)
    return fq[:n], zq[:n]


# ------------------ Kernel B: per-edge label-attention message --------------
def _edge_msg_kernel(q_ref, zq_ref, lbl_ref, ea_ref,
                     we_t_ref, be_ref, wltk_ref, bltk_ref, wkto_t_ref, bkto_ref,
                     msg_ref, *, label_k):
    q = q_ref[...]                                              # [TE, Cp]
    ek = jnp.dot(ea_ref[...], we_t_ref[...],
                 preferred_element_type=jnp.float32) + be_ref[...]   # lin_key_edge
    qk = jnp.sum(q * ek, axis=-1, keepdims=True)                # <q_i, edge_k>
    qs = jnp.sum(q, axis=-1, keepdims=True)                     # sum_c q_i
    lz = lbl_ref[...] * zq_ref[...]                             # label_j * (q_i@emb^T)
    bltk = bltk_ref[...]                                        # [1, K]
    inv_sqrt_k = 1.0 / math.sqrt(float(label_k))

    # scores s[:, k]: K=4 is degenerate for the MXU -> unrolled VPU/XLU work.
    s_cols = []
    for k in range(label_k):
        lk = jnp.sum(lz * wltk_ref[k:k + 1, :], axis=-1, keepdims=True)
        s_cols.append((qk + lk + qs * bltk[0:1, k:k + 1]) * inv_sqrt_k)

    # label_softmax over the K scores (unrolled)
    m = s_cols[0]
    for k in range(1, label_k):
        m = jnp.maximum(m, s_cols[k])
    e_cols = [jnp.exp(c - m) for c in s_cols]
    denom = e_cols[0]
    for k in range(1, label_k):
        denom = denom + e_cols[k]
    inv_denom = 1.0 / denom

    # msg = (s*alpha) @ Wkto^T + bkto; contraction over K=4 as broadcast FMAs.
    acc = jnp.broadcast_to(bkto_ref[...], q.shape)
    for k in range(label_k):
        xx_k = s_cols[k] * e_cols[k] * inv_denom                # [TE, 1]
        acc = acc + xx_k * wkto_t_ref[k:k + 1, :]
    msg_ref[...] = acc


def edge_messages(q_i, zq_i, l_j, eap, p):
    e = q_i.shape[0]
    tile = _row_tile(e)
    q_i = _pad_rows_to(q_i, tile)
    zq_i = _pad_rows_to(zq_i, tile)
    l_j = _pad_rows_to(l_j, tile)
    ea = _pad_rows_to(eap, tile)
    ep = q_i.shape[0]
    Cp, Lp, EDp, K = q_i.shape[1], zq_i.shape[1], ea.shape[1], p['label_k']
    msg = pl.pallas_call(
        partial(_edge_msg_kernel, label_k=K),
        out_shape=jax.ShapeDtypeStruct((ep, Cp), jnp.float32),
        grid_spec=pltpu.PrefetchScalarGridSpec(
            num_scalar_prefetch=0,
            grid=(ep // tile,),
            in_specs=[
                pl.BlockSpec((tile, Cp), lambda i: (i, 0)),
                pl.BlockSpec((tile, Lp), lambda i: (i, 0)),
                pl.BlockSpec((tile, Lp), lambda i: (i, 0)),
                pl.BlockSpec((tile, EDp), lambda i: (i, 0)),
                pl.BlockSpec((EDp, Cp), lambda i: (0, 0)),
                pl.BlockSpec((1, Cp), lambda i: (0, 0)),
                pl.BlockSpec((K, Lp), lambda i: (0, 0)),
                pl.BlockSpec((1, K), lambda i: (0, 0)),
                pl.BlockSpec((K, Cp), lambda i: (0, 0)),
                pl.BlockSpec((1, Cp), lambda i: (0, 0)),
            ],
            out_specs=pl.BlockSpec((tile, Cp), lambda i: (i, 0))),
        compiler_params=pltpu.CompilerParams(dimension_semantics=("parallel",)),
    )(q_i, zq_i, l_j, ea, p['we_t'], p['be'], p['wltk'], p['bltk'],
      p['wkto_t'], p['bkto'])
    return msg[:e]


# ------ Kernel C: skip + add (+relu), last layer (no next projection) --------
def _combine_kernel(x_ref, agg_ref, ws_t_ref, bs_ref, out_ref, *, relu):
    out = agg_ref[...] + jnp.dot(x_ref[...], ws_t_ref[...],
                                 preferred_element_type=jnp.float32) + bs_ref[...]
    if relu:
        out = jnp.maximum(out, 0.0)
    out_ref[...] = out


def combine(x, agg, p, relu):
    n = x.shape[0]
    tile = _row_tile(n)
    xp = _pad_rows_to(x, tile)
    aggp = _pad_rows_to(agg, tile)
    np_, Fp = xp.shape
    Cp = aggp.shape[1]
    out = pl.pallas_call(
        partial(_combine_kernel, relu=relu),
        out_shape=jax.ShapeDtypeStruct((np_, Cp), jnp.float32),
        grid_spec=pltpu.PrefetchScalarGridSpec(
            num_scalar_prefetch=0,
            grid=(np_ // tile,),
            in_specs=[
                pl.BlockSpec((tile, Fp), lambda i: (i, 0)),
                pl.BlockSpec((tile, Cp), lambda i: (i, 0)),
                pl.BlockSpec((Fp, Cp), lambda i: (0, 0)),
                pl.BlockSpec((1, Cp), lambda i: (0, 0)),
            ],
            out_specs=pl.BlockSpec((tile, Cp), lambda i: (i, 0))),
        compiler_params=pltpu.CompilerParams(dimension_semantics=("parallel",)),
    )(xp, aggp, p['ws_t'], p['bs'])
    return out[:n]


# ---- Kernel D (fused): combine(layer l) + relu + node_proj(layer l+1) -------
def _combine_proj_kernel(x_ref, agg_ref, ws_t_ref, bs_ref,
                         wq_t_ref, bq_ref, emb_t_ref,
                         xout_ref, fq_ref, zq_ref):
    xn = agg_ref[...] + jnp.dot(x_ref[...], ws_t_ref[...],
                                preferred_element_type=jnp.float32) + bs_ref[...]
    xn = jnp.maximum(xn, 0.0)                       # relu between layers
    xout_ref[...] = xn
    fq = jnp.dot(xn, wq_t_ref[...], preferred_element_type=jnp.float32) + bq_ref[...]
    fq_ref[...] = fq
    zq_ref[...] = jnp.dot(fq, emb_t_ref[...], preferred_element_type=jnp.float32)


def combine_proj(x, agg, p, p_next):
    n = x.shape[0]
    tile = _row_tile(n)
    xp = _pad_rows_to(x, tile)
    aggp = _pad_rows_to(agg, tile)
    np_, Fp = xp.shape
    Cp = aggp.shape[1]
    Cn, Lp = p_next['wq_t'].shape[1], p_next['emb_t'].shape[1]
    xo, fq, zq = pl.pallas_call(
        _combine_proj_kernel,
        out_shape=(jax.ShapeDtypeStruct((np_, Cp), jnp.float32),
                   jax.ShapeDtypeStruct((np_, Cn), jnp.float32),
                   jax.ShapeDtypeStruct((np_, Lp), jnp.float32)),
        grid_spec=pltpu.PrefetchScalarGridSpec(
            num_scalar_prefetch=0,
            grid=(np_ // tile,),
            in_specs=[
                pl.BlockSpec((tile, Fp), lambda i: (i, 0)),
                pl.BlockSpec((tile, Cp), lambda i: (i, 0)),
                pl.BlockSpec((Fp, Cp), lambda i: (0, 0)),
                pl.BlockSpec((1, Cp), lambda i: (0, 0)),
                pl.BlockSpec((Cp, Cn), lambda i: (0, 0)),
                pl.BlockSpec((1, Cn), lambda i: (0, 0)),
                pl.BlockSpec((Cn, Lp), lambda i: (0, 0)),
            ],
            out_specs=[
                pl.BlockSpec((tile, Cp), lambda i: (i, 0)),
                pl.BlockSpec((tile, Cn), lambda i: (i, 0)),
                pl.BlockSpec((tile, Lp), lambda i: (i, 0)),
            ]),
        compiler_params=pltpu.CompilerParams(dimension_semantics=("parallel",)),
    )(xp, aggp, p['ws_t'], p['bs'], p_next['wq_t'], p_next['bq'], p_next['emb_t'])
    return xo[:n], fq[:n], zq[:n]


# ------------------ parameter init (PyTorch layout) & prep -------------------
def init_layer_params(key, in_dim, out_dim, edge_dim=8, label_dim=112, label_k=4):
    ks = jax.random.split(key, 6)

    def lin(k, fan_out, fan_in):
        k1, k2 = jax.random.split(k)
        w = jax.random.normal(k1, (fan_out, fan_in), jnp.float32) / math.sqrt(fan_in)
        b = jax.random.normal(k2, (fan_out,), jnp.float32) * 0.01
        return w, b

    wq, bq = lin(ks[0], out_dim, in_dim)            # lin_query
    we, be = lin(ks[1], out_dim, edge_dim)          # lin_key_edge
    wltk, bltk = lin(ks[2], label_k, label_dim)     # lin_label_to_k
    wkto, bkto = lin(ks[3], out_dim, label_k)       # lin_k_to_out
    ws, bs = lin(ks[4], out_dim, in_dim)            # lin_skip
    emb = jax.random.normal(ks[5], (label_dim, out_dim), jnp.float32) * math.sqrt(
        2.0 / (label_dim + out_dim))                # emb_label (xavier-style scale)
    # lin_key_node / lin_value / lin_label exist in the PyTorch module but do not
    # affect the forward output (self_attention result is discarded) -> omitted.
    return dict(wq=wq, bq=bq, we=we, be=be, wltk=wltk, bltk=bltk,
                wkto=wkto, bkto=bkto, ws=ws, bs=bs, emb=emb)


def prepare_layer_params(p):
    """Pre-transpose and lane-pad (to multiples of 128) once on the host."""
    out_dim, in_dim = p['wq'].shape
    edge_dim = p['we'].shape[1]
    K, label_dim = p['wltk'].shape
    Fp = _round_up(in_dim, LANE)
    Cp = _round_up(out_dim, LANE)
    EDp = _round_up(edge_dim, LANE)
    Lp = _round_up(label_dim, LANE)
    return dict(
        wq_t=_pad2(p['wq'].T, Fp, Cp),  bq=_pad2(p['bq'][None, :], 1, Cp),
        emb_t=_pad2(p['emb'].T, Cp, Lp),
        we_t=_pad2(p['we'].T, EDp, Cp), be=_pad2(p['be'][None, :], 1, Cp),
        wltk=_pad2(p['wltk'], K, Lp),   bltk=p['bltk'][None, :],
        wkto_t=_pad2(p['wkto'].T, K, Cp), bkto=_pad2(p['bkto'][None, :], 1, Cp),
        ws_t=_pad2(p['ws'].T, Fp, Cp),  bs=_pad2(p['bs'][None, :], 1, Cp),
        label_k=K, out_dim=out_dim,
    )


# ------------------------------ model glue ----------------------------------
def attention_gnn_forward(prepped, x, edge_index, edge_attr, y):
    """Eval-mode forward; all dropouts are identity."""
    src, tgt = edge_index[0], edge_index[1]
    n = x.shape[0]
    x_cur = _pad_cols(x)            # lane-pad activations once; keep padded throughout
    yp = _pad_cols(y)
    eap = _pad_cols(edge_attr)

    p0 = prepped[0]
    fq, zq = node_proj(x_cur, p0['wq_t'], p0['bq'], p0['emb_t'])   # Kernel A

    for li, p in enumerate(prepped):
        # TODO(synk): per-edge gathers stay in XLA (jnp.take); fusing them into the
        # edge kernel would need per-row manual DMA gather over scalar-prefetched ids.
        q_i = jnp.take(fq, tgt, axis=0)
        zq_i = jnp.take(zq, tgt, axis=0)
        l_j = jnp.take(yp, src, axis=0)
        msg = edge_messages(q_i, zq_i, l_j, eap, p)                # Kernel B
        # TODO(synk): aggr='add' scatter uses jax.ops.segment_sum (data-dependent
        # scatter is not cleanly expressible through BlockSpec index maps).
        agg = jax.ops.segment_sum(msg, tgt, num_segments=n)
        if li < len(prepped) - 1:
            # fused: skip-add + relu of layer li, then lin_query/emb of layer li+1
            x_cur, fq, zq = combine_proj(x_cur, agg, p, prepped[li + 1])  # Kernel D
        else:
            x_cur = combine(x_cur, agg, p, relu=False)             # Kernel C
    return x_cur[:, :prepped[-1]['out_dim']]


# --------------------- literal pure-JAX reference ----------------------------
def _layer_forward_ref(p, x, edge_index, edge_attr, y, apply_relu):
    src, tgt = edge_index[0], edge_index[1]
    K = p['wltk'].shape[0]
    feat_q = x @ p['wq'].T + p['bq']
    q_i = feat_q[tgt]
    l_j = y[src]
    edge_k = edge_attr @ p['we'].T + p['be']
    embedded = l_j[:, :, None] * p['emb'][None, :, :]              # [E, L, C]
    k_labels = jnp.einsum('ad,edc->eac', p['wltk'], embedded) + p['bltk'][None, :, None]
    s = jnp.einsum('ec,eac->ea', q_i, edge_k[:, None, :] + k_labels) / math.sqrt(K)
    alpha = jax.nn.softmax(s, axis=1)
    xx = s * alpha
    msg = xx @ p['wkto'].T + p['bkto']
    agg = jax.ops.segment_sum(msg, tgt, num_segments=x.shape[0])
    out = agg + x @ p['ws'].T + p['bs']
    return jnp.maximum(out, 0.0) if apply_relu else out


def attention_gnn_forward_ref(params, x, edge_index, edge_attr, y):
    for li, p in enumerate(params):
        x = _layer_forward_ref(p, x, edge_index, edge_attr, y,
                               apply_relu=(li < len(params) - 1))
    return x


if __name__ == "__main__":
    key = jax.random.PRNGKey(0)
    N, E = 16, 40
    in_dim, hid_dim, out_dim = 8, 32, 112
    edge_dim, label_dim, label_k = 8, 112, 4

    k_x, k_ea, k_y, k_ei, k_p = jax.random.split(key, 5)
    x = jax.random.normal(k_x, (N, in_dim), jnp.float32)
    edge_attr = jax.random.normal(k_ea, (E, edge_dim), jnp.float32)
    y = (jax.random.uniform(k_y, (N, label_dim)) < 0.1).astype(jnp.float32)  # eval_masked_y
    edge_index = jax.random.randint(k_ei, (2, E), 0, N, dtype=jnp.int32)

    dims = [(in_dim, hid_dim), (hid_dim, hid_dim), (hid_dim, out_dim)]
    pkeys = jax.random.split(k_p, len(dims))
    raw = [init_layer_params(pk, di, do, edge_dim, label_dim, label_k)
           for pk, (di, do) in zip(pkeys, dims)]
    prepped = [prepare_layer_params(p) for p in raw]

    out = attention_gnn_forward(prepped, x, edge_index, edge_attr, y)
    jax.block_until_ready(out)
    assert out.shape == (N, out_dim)

    # Validate the factored label-attention against the literal reference.
    ref = attention_gnn_forward_ref(raw, x, edge_index, edge_attr, y)
    err = float(jnp.max(jnp.abs(out - ref)))
    scale = float(jnp.max(jnp.abs(ref))) + 1.0
    assert err <= 1e-2 * scale, f"mismatch vs reference: max|diff|={err}, scale={scale}"

    print("KERNEL_OK")
</pallas_src>

<mosaic_0001>
module attributes {stable_mosaic.version = 11 : i64} {
  func.func @_node_proj_kernel(%arg0: i32, %arg1: memref<16x128xf32, #tpu.memory_space<vmem>>, %arg2: memref<128x128xf32, #tpu.memory_space<vmem>>, %arg3: memref<1x128xf32, #tpu.memory_space<vmem>>, %arg4: memref<128x128xf32, #tpu.memory_space<vmem>>, %arg5: memref<16x128xf32, #tpu.memory_space<vmem>>, %arg6: memref<16x128xf32, #tpu.memory_space<vmem>>) attributes {dimension_semantics = [#tpu.dimension_semantics<parallel>], iteration_bounds = array<i64: 1>, scalar_prefetch = 0 : i64, scratch_operands = 0 : i64, tpu.core_type = #tpu.core_type<tc>, window_params = [{transform_indices = @transform_0, window_bounds = array<i64: 16, 128>}, {pipeline_mode = #tpu.pipeline_mode<synchronous>, transform_indices = @transform_1, window_bounds = array<i64: 128, 128>}, {pipeline_mode = #tpu.pipeline_mode<synchronous>, transform_indices = @transform_2, window_bounds = array<i64: 1, 128>}, {pipeline_mode = #tpu.pipeline_mode<synchronous>, transform_indices = @transform_3, window_bounds = array<i64: 128, 128>}, {transform_indices = @transform_4, window_bounds = array<i64: 16, 128>}, {transform_indices = @transform_5, window_bounds = array<i64: 16, 128>}]} {
    %c0 = arith.constant 0 : index
    %c0_0 = arith.constant 0 : index
    %0 = vector.load %arg1[%c0, %c0_0] : memref<16x128xf32, #tpu.memory_space<vmem>>, vector<16x128xf32>
    %c0_1 = arith.constant 0 : index
    %c0_2 = arith.constant 0 : index
    %1 = vector.load %arg2[%c0_1, %c0_2] : memref<128x128xf32, #tpu.memory_space<vmem>>, vector<128x128xf32>
    %cst = arith.constant dense<0.000000e+00> : vector<16x128xf32>
    %2 = tpu.matmul %0, %1, %cst {dimension_numbers = #tpu.dot_dimension_numbers<[1], [0], [0], [1], [0, 0, 1, 1], [], []>} : vector<16x128xf32>, vector<128x128xf32>, vector<16x128xf32> -> vector<16x128xf32>
    %c0_3 = arith.constant 0 : index
    %c0_4 = arith.constant 0 : index
    %3 = vector.load %arg3[%c0_3, %c0_4] : memref<1x128xf32, #tpu.memory_space<vmem>>, vector<1x128xf32>
    %4 = vector.broadcast %3 : vector<1x128xf32> to vector<16x128xf32>
    %5 = arith.addf %2, %4 : vector<16x128xf32>
    %c0_5 = arith.constant 0 : index
    %c0_6 = arith.constant 0 : index
    %6 = vector.load %arg5[%c0_5, %c0_6] : memref<16x128xf32, #tpu.memory_space<vmem>>, vector<16x128xf32>
    tpu.vector_store %arg5[%c0_5, %c0_6], %5 {strides = array<i32>} : memref<16x128xf32, #tpu.memory_space<vmem>>, vector<16x128xf32>,
    %c0_7 = arith.constant 0 : index
    %c0_8 = arith.constant 0 : index
    %7 = vector.load %arg4[%c0_7, %c0_8] : memref<128x128xf32, #tpu.memory_space<vmem>>, vector<128x128xf32>
    %cst_9 = arith.constant dense<0.000000e+00> : vector<16x128xf32>
    %8 = tpu.matmul %5, %7, %cst_9 {dimension_numbers = #tpu.dot_dimension_numbers<[1], [0], [0], [1], [0, 0, 1, 1], [], []>} : vector<16x128xf32>, vector<128x128xf32>, vector<16x128xf32> -> vector<16x128xf32>
    %c0_10 = arith.constant 0 : index
    %c0_11 = arith.constant 0 : index
    %9 = vector.load %arg6[%c0_10, %c0_11] : memref<16x128xf32, #tpu.memory_space<vmem>>, vector<16x128xf32>
    tpu.vector_store %arg6[%c0_10, %c0_11], %8 {strides = array<i32>} : memref<16x128xf32, #tpu.memory_space<vmem>>, vector<16x128xf32>,
    return
  }
  func.func @transform_0(%arg0: i32) -> (i32, i32) {
    %c0_i32 = arith.constant 0 : i32
    %c0_i32_0 = arith.constant 0 : i32
    return %arg0, %c0_i32 : i32, i32
  }
  func.func @transform_1(%arg0: i32) -> (i32, i32) {
    %c0_i32 = arith.constant 0 : i32
    %c0_i32_0 = arith.constant 0 : i32
    %c0_i32_1 = arith.constant 0 : i32
    return %c0_i32, %c0_i32_0 : i32, i32
  }
  func.func @transform_2(%arg0: i32) -> (i32, i32) {
    %c0_i32 = arith.constant 0 : i32
    %c0_i32_0 = arith.constant 0 : i32
    %c0_i32_1 = arith.constant 0 : i32
    return %c0_i32, %c0_i32_0 : i32, i32
  }
  func.func @transform_3(%arg0: i32) -> (i32, i32) {
    %c0_i32 = arith.constant 0 : i32
    %c0_i32_0 = arith.constant 0 : i32
    %c0_i32_1 = arith.constant 0 : i32
    return %c0_i32, %c0_i32_0 : i32, i32
  }
  func.func @transform_4(%arg0: i32) -> (i32, i32) {
    %c0_i32 = arith.constant 0 : i32
    %c0_i32_0 = arith.constant 0 : i32
    return %arg0, %c0_i32 : i32, i32
  }
  func.func @transform_5(%arg0: i32) -> (i32, i32) {
    %c0_i32 = arith.constant 0 : i32
    %c0_i32_0 = arith.constant 0 : i32
    return %arg0, %c0_i32 : i32, i32
  }
}

</mosaic_0001>

<llo_original>
// kernel: tpu_custom_call.1
$region0: #{tpu_custom_call.1}
  #allocation0 [shape = 'u32[]', space=smem, size = 0x4, offset = 0x4, fixed_abs, tag = 'smem constant byte address 0x4 - core index']
  #allocation1 [shape = 'u32[144,128]{1,0:T(1,128)}', space=vmem, size = 0x12000, scoped, tag = 'internal scratch']
  %s0 = inlined_call_operand.hbm [shape: f32[16,128], index: 0, kind: input, shape index: {}]
  %s1 = inlined_call_operand.hbm [shape: f32[128,128], index: 1, kind: input, shape index: {}]
  %s2 = inlined_call_operand.vmem [shape: f32[1,128], index: 2, kind: input, shape index: {}]
  %s3 = inlined_call_operand.hbm [shape: f32[128,128], index: 3, kind: input, shape index: {}]
  %s4 = inlined_call_operand.hbm [shape: f32[16,128], index: 4, kind: output, shape index: {0}]
  %s5 = inlined_call_operand.hbm [shape: f32[16,128], index: 5, kind: output, shape index: {1}]
  %6 = xla_tuple %s4, %s5
  %s7 = sld [smem:[#allocation0]]
  $region46: #{tpu_custom_call.1} parent=0
    _
  %s9 = ssub.s32 1, %s7
  %s10 = scalar_select 0, %s9, %s7
  $region1: #{tpu_custom_call.1} parent=0
    #allocation2 [shape = 'u8[8192]{0}', space=vmem, size = 0x2000, scoped, tag = 'input window, operand 0, single buffered']
    #allocation3 [shape = 's32[1]{0}', space=sflag, size = 0x4, scoped, tag = 'scoped memory for tpu_custom_call.1']
    #allocation4 [shape = 's32[1]{0}', space=sflag, size = 0x4, scoped, tag = 'scoped memory for tpu_custom_call.1']
    #allocation5 [shape = 'u8[65536]{0}', space=vmem, size = 0x10000, scoped, tag = 'input window, operand 1, single buffered']
    #allocation6 [shape = 's32[1]{0}', space=sflag, size = 0x4, scoped, tag = 'scoped memory for tpu_custom_call.1']
    #allocation7 [shape = 'u8[65536]{0}', space=vmem, size = 0x10000, scoped, tag = 'input window, operand 3, single buffered']
    #allocation8 [shape = 'u8[8192]{0}', space=vmem, size = 0x2000, scoped, tag = 'output window, operand 0, single buffered']
    #allocation9 [shape = 'u8[8192]{0}', space=vmem, size = 0x2000, scoped, tag = 'output window, operand 1, single buffered']
    #allocation10 [shape = 's32[1]{0}', space=sflag, size = 0x4, scoped, tag = 'scoped memory for tpu_custom_call.1']
    %11 = vsyncpa [#allocation3], 0
    %12 = vsyncpa [#allocation6], 0
    %13 = vsyncpa [#allocation4], 0
    %14 = vsyncpa [#allocation10], 0
    // Predicated region
    $region2: #{tpu_custom_call.1} parent=1 // pred_check
      _
    $region3: #{tpu_custom_call.1} parent=1 // pred_check_branch
      %16 = sbr.rel (0) target = $region5
    $region4: #{tpu_custom_call.1} parent=1 // pred_region
      %s18 = ssub.s32 256, 256
      %19 = vsyncadd [#allocation3], %s18
      %s20 = sshll.u32 [#allocation2], 4
      %s21 = int_to_ptr.vmem [resolvable:$true] %s20
      %26 = dma.hbm_to_vmem [thread:$0]  %s0, 256, %s21, [#allocation3], 128, 128, 8
    $region5: #{tpu_custom_call.1} parent=1 // pred_fallthru
      _
    // Predicated region
    $region6: #{tpu_custom_call.1} parent=1 // pred_check
      _
    $region7: #{tpu_custom_call.1} parent=1 // pred_check_branch
      %28 = sbr.rel (0) target = $region9
    $region8: #{tpu_custom_call.1} parent=1 // pred_region
      %s30 = ssub.s32 2048, 2048
      %31 = vsyncadd [#allocation6], %s30
      %s32 = sshll.u32 [#allocation5], 4
      %s33 = int_to_ptr.vmem [resolvable:$true] %s32
      %38 = dma.hbm_to_vmem [thread:$0]  %s1, 2048, %s33, [#allocation6], 128, 128, 8
    $region9: #{tpu_custom_call.1} parent=1 // pred_fallthru
      _
    // Predicated region
    $region10: #{tpu_custom_call.1} parent=1 // pred_check
      _
    $region11: #{tpu_custom_call.1} parent=1 // pred_check_branch
      %40 = sbr.rel (0) target = $region13
    $region12: #{tpu_custom_call.1} parent=1 // pred_region
      _
    $region13: #{tpu_custom_call.1} parent=1 // pred_fallthru
      _
    // Predicated region
    $region14: #{tpu_custom_call.1} parent=1 // pred_check
      _
    $region15: #{tpu_custom_call.1} parent=1 // pred_check_branch
      %42 = sbr.rel (0) target = $region17
    $region16: #{tpu_custom_call.1} parent=1 // pred_region
      %s44 = ssub.s32 2048, 2048
      %45 = vsyncadd [#allocation6], %s44
      %s46 = sshll.u32 [#allocation7], 4
      %s47 = int_to_ptr.vmem [resolvable:$true] %s46
      %52 = dma.hbm_to_vmem [thread:$0]  %s3, 2048, %s47, [#allocation6], 128, 128, 8
    $region17: #{tpu_custom_call.1} parent=1 // pred_fallthru
      _
    // Predicated region
    $region18: #{tpu_custom_call.1} parent=1 // pred_check
      _
    $region19: #{tpu_custom_call.1} parent=1 // pred_check_branch
      %54 = sbr.rel (0) target = $region21
    $region20: #{tpu_custom_call.1} parent=1 // pred_region
      %55 = dma.done [#allocation3], 256
    $region21: #{tpu_custom_call.1} parent=1 // pred_fallthru
      _
    // Predicated region
    $region22: #{tpu_custom_call.1} parent=1 // pred_check
      _
    $region23: #{tpu_custom_call.1} parent=1 // pred_check_branch
      %57 = sbr.rel (0) target = $region25
    $region24: #{tpu_custom_call.1} parent=1 // pred_region
      %58 = dma.done [#allocation6], 2048
    $region25: #{tpu_custom_call.1} parent=1 // pred_fallthru
      _
    // Predicated region
    $region26: #{tpu_custom_call.1} parent=1 // pred_check
      _
    $region27: #{tpu_custom_call.1} parent=1 // pred_check_branch
      %60 = sbr.rel (0) target = $region29
    $region28: #{tpu_custom_call.1} parent=1 // pred_region
      %61 = dma.done [#allocation6], 2048
    $region29: #{tpu_custom_call.1} parent=1 // pred_fallthru
      _
    %v62 = vld [vmem:[#allocation2] sm:$0xff]
    %v63 = vld [vmem:[#allocation2 + $0x8] sm:$0xff]
    %v64 = vld [vmem:[#allocation5] sm:$0xff]
    %v65 = vld [vmem:[#allocation5 + $0x8] sm:$0xff]
    %v66 = vld [vmem:[#allocation5 + $0x10] sm:$0xff]
    %v67 = vld [vmem:[#allocation5 + $0x18] sm:$0xff]
    %v68 = vld [vmem:[#allocation5 + $0x20] sm:$0xff]
    %v69 = vld [vmem:[#allocation5 + $0x28] sm:$0xff]
    %v70 = vld [vmem:[#allocation5 + $0x30] sm:$0xff]
    %v71 = vld [vmem:[#allocation5 + $0x38] sm:$0xff]
    %v72 = vld [vmem:[#allocation5 + $0x40] sm:$0xff]
    %v73 = vld [vmem:[#allocation5 + $0x48] sm:$0xff]
    %v74 = vld [vmem:[#allocation5 + $0x50] sm:$0xff]
    %v75 = vld [vmem:[#allocation5 + $0x58] sm:$0xff]
    %v76 = vld [vmem:[#allocation5 + $0x60] sm:$0xff]
    %v77 = vld [vmem:[#allocation5 + $0x68] sm:$0xff]
    %v78 = vld [vmem:[#allocation5 + $0x70] sm:$0xff]
    %v79 = vld [vmem:[#allocation5 + $0x78] sm:$0xff]
    %v80 = vld [vmem:[%s2] sm:$0x1]
    %v82 = vlaneseq
    %v83 = vshrl.u32 %v82, 7
    %v84 = vsub.s32 0, %v83
    %v85 = vrot.slane %v80, %v84
    %87 = vmatprep.subr.mxu0 0.0
    %88 = vmatpush1.msra.mxu0 %v79
    %89 = vmatprep.subr.mxu0 0.0
    %90 = vmatpush1.msra.mxu0 %v78
    %91 = vmatprep.subr.mxu0 0.0
    %92 = vmatpush1.msra.mxu0 %v77
    %93 = vmatprep.subr.mxu0 0.0
    %94 = vmatpush1.msra.mxu0 %v76
    %95 = vmatprep.subr.mxu0 0.0
    %96 = vmatpush1.msra.mxu0 %v75
    %97 = vmatprep.subr.mxu0 0.0
    %98 = vmatpush1.msra.mxu0 %v74
    %99 = vmatprep.subr.mxu0 0.0
    %100 = vmatpush1.msra.mxu0 %v73
    %101 = vmatprep.subr.mxu0 0.0
    %102 = vmatpush1.msra.mxu0 %v72
    %103 = vmatprep.subr.mxu0 0.0
    %104 = vmatpush1.msra.mxu0 %v71
    %105 = vmatprep.subr.mxu0 0.0
    %106 = vmatpush1.msra.mxu0 %v70
    %107 = vmatprep.subr.mxu0 0.0
    %108 = vmatpush1.msra.mxu0 %v69
    %109 = vmatprep.subr.mxu0 0.0
    %110 = vmatpush1.msra.mxu0 %v68
    %111 = vmatprep.subr.mxu0 0.0
    %112 = vmatpush1.msra.mxu0 %v67
    %113 = vmatprep.subr.mxu0 0.0
    %114 = vmatpush1.msra.mxu0 %v66
    %115 = vmatprep.subr.mxu0 0.0
    %116 = vmatpush1.msra.mxu0 %v65
    %117 = vmatprep.subr.mxu0 0.0
    %118 = vmatpush1.msra.mxu0 %v64
    %119 = vmatprep.subr.mxu0 0.0
    %120 = vmatpush2.msra.mxu0 0.0
    %121 = vmatprep.subr.mxu0 0.0
    %122 = vmatpush2.msra.mxu0 0.0
    %123 = vmatprep.subr.mxu0 0.0
    %124 = vmatpush2.msra.mxu0 0.0
    %125 = vmatprep.subr.mxu0 0.0
    %126 = vmatpush2.msra.mxu0 0.0
    %127 = vmatprep.subr.mxu0 0.0
    %128 = vmatpush2.msra.mxu0 0.0
    %129 = vmatprep.subr.mxu0 0.0
    %130 = vmatpush2.msra.mxu0 0.0
    %131 = vmatprep.subr.mxu0 0.0
    %132 = vmatpush2.msra.mxu0 0.0
    %133 = vmatprep.subr.mxu0 0.0
    %134 = vmatpush2.msra.mxu0 0.0
    %135 = vmatprep.subr.mxu0 0.0
    %136 = vmatpush2.msra.mxu0 0.0
    %137 = vmatprep.subr.mxu0 0.0
    %138 = vmatpush2.msra.mxu0 0.0
    %139 = vmatprep.subr.mxu0 0.0
    %140 = vmatpush2.msra.mxu0 0.0
    %141 = vmatprep.subr.mxu0 0.0
    %142 = vmatpush2.msra.mxu0 0.0
    %143 = vmatprep.subr.mxu0 0.0
    %144 = vmatpush2.msra.mxu0 0.0
    %145 = vmatprep.subr.mxu0 0.0
    %146 = vmatpush2.msra.mxu0 0.0
    %147 = vmatprep.subr.mxu0 0.0
    %148 = vmatpush2.msra.mxu0 0.0
    %149 = vmatprep.subr.mxu0 0.0
    %150 = vmatpush2.msra.mxu0 0.0
    %151 = vmatprep.mubr.f32.mxu0 0.0
    %152 = vmatmul.mubr.f32.gmra.mxu0 %v62
    %v153 = vpop.f32.mrf.mxu0
    %v154 = vadd.f32 %v85, %v153
    %v155 = vpop.f32.mrf.mxu0
    %156 = vmatprep.mubr.f32.mxu0 0.0
    %157 = vmatmul.mubr.f32.gmra.mxu0 %v63
    %v158 = vpop.f32.mrf.mxu0
    %v159 = vadd.f32 %v85, %v158
    %v160 = vpop.f32.mrf.mxu0
    %161 = vdwg.mxu0
    %162 = vst [vmem:[#allocation8] sm:$0xff] %v154
    %163 = vst [vmem:[#allocation8 + $0x8] sm:$0xff] %v159
    %v164 = vld [vmem:[#allocation7] sm:$0xff]
    %v165 = vld [vmem:[#allocation7 + $0x8] sm:$0xff]
    %v166 = vld [vmem:[#allocation7 + $0x10] sm:$0xff]
    %v167 = vld [vmem:[#allocation7 + $0x18] sm:$0xff]
    %v168 = vld [vmem:[#allocation7 + $0x20] sm:$0xff]
    %v169 = vld [vmem:[#allocation7 + $0x28] sm:$0xff]
    %v170 = vld [vmem:[#allocation7 + $0x30] sm:$0xff]
    %v171 = vld [vmem:[#allocation7 + $0x38] sm:$0xff]
    %v172 = vld [vmem:[#allocation7 + $0x40] sm:$0xff]
    %v173 = vld [vmem:[#allocation7 + $0x48] sm:$0xff]
    %v174 = vld [vmem:[#allocation7 + $0x50] sm:$0xff]
    %v175 = vld [vmem:[#allocation7 + $0x58] sm:$0xff]
    %v176 = vld [vmem:[#allocation7 + $0x60] sm:$0xff]
    %v177 = vld [vmem:[#allocation7 + $0x68] sm:$0xff]
    %v178 = vld [vmem:[#allocation7 + $0x70] sm:$0xff]
    %v179 = vld [vmem:[#allocation7 + $0x78] sm:$0xff]
    %180 = vmatprep.subr.mxu0 0.0
    %181 = vmatpush1.msra.mxu0 %v179
    %182 = vmatprep.subr.mxu0 0.0
    %183 = vmatpush1.msra.mxu0 %v178
    %184 = vmatprep.subr.mxu0 0.0
    %185 = vmatpush1.msra.mxu0 %v177
    %186 = vmatprep.subr.mxu0 0.0
    %187 = vmatpush1.msra.mxu0 %v176
    %188 = vmatprep.subr.mxu0 0.0
    %189 = vmatpush1.msra.mxu0 %v175
    %190 = vmatprep.subr.mxu0 0.0
    %191 = vmatpush1.msra.mxu0 %v174
    %192 = vmatprep.subr.mxu0 0.0
    %193 = vmatpush1.msra.mxu0 %v173
    %194 = vmatprep.subr.mxu0 0.0
    %195 = vmatpush1.msra.mxu0 %v172
    %196 = vmatprep.subr.mxu0 0.0
    %197 = vmatpush1.msra.mxu0 %v171
    %198 = vmatprep.subr.mxu0 0.0
    %199 = vmatpush1.msra.mxu0 %v170
    %200 = vmatprep.subr.mxu0 0.0
    %201 = vmatpush1.msra.mxu0 %v169
    %202 = vmatprep.subr.mxu0 0.0
    %203 = vmatpush1.msra.mxu0 %v168
    %204 = vmatprep.subr.mxu0 0.0
    %205 = vmatpush1.msra.mxu0 %v167
    %206 = vmatprep.subr.mxu0 0.0
    %207 = vmatpush1.msra.mxu0 %v166
    %208 = vmatprep.subr.mxu0 0.0
    %209 = vmatpush1.msra.mxu0 %v165
    %210 = vmatprep.subr.mxu0 0.0
    %211 = vmatpush1.msra.mxu0 %v164
    %212 = vmatprep.subr.mxu0 0.0
    %213 = vmatpush2.msra.mxu0 0.0
    %214 = vmatprep.subr.mxu0 0.0
    %215 = vmatpush2.msra.mxu0 0.0
    %216 = vmatprep.subr.mxu0 0.0
    %217 = vmatpush2.msra.mxu0 0.0
    %218 = vmatprep.subr.mxu0 0.0
    %219 = vmatpush2.msra.mxu0 0.0
    %220 = vmatprep.subr.mxu0 0.0
    %221 = vmatpush2.msra.mxu0 0.0
    %222 = vmatprep.subr.mxu0 0.0
    %223 = vmatpush2.msra.mxu0 0.0
    %224 = vmatprep.subr.mxu0 0.0
    %225 = vmatpush2.msra.mxu0 0.0
    %226 = vmatprep.subr.mxu0 0.0
    %227 = vmatpush2.msra.mxu0 0.0
    %228 = vmatprep.subr.mxu0 0.0
    %229 = vmatpush2.msra.mxu0 0.0
    %230 = vmatprep.subr.mxu0 0.0
    %231 = vmatpush2.msra.mxu0 0.0
    %232 = vmatprep.subr.mxu0 0.0
    %233 = vmatpush2.msra.mxu0 0.0
    %234 = vmatprep.subr.mxu0 0.0
    %235 = vmatpush2.msra.mxu0 0.0
    %236 = vmatprep.subr.mxu0 0.0
    %237 = vmatpush2.msra.mxu0 0.0
    %238 = vmatprep.subr.mxu0 0.0
    %239 = vmatpush2.msra.mxu0 0.0
    %240 = vmatprep.subr.mxu0 0.0
    %241 = vmatpush2.msra.mxu0 0.0
    %242 = vmatprep.subr.mxu0 0.0
    %243 = vmatpush2.msra.mxu0 0.0
    %244 = vmatprep.mubr.f32.mxu0 0.0
    %245 = vmatmul.mubr.f32.gmra.mxu0 %v154
    %v246 = vpop.f32.mrf.mxu0
    %v247 = vadd.f32 0.0, %v246
    %v248 = vpop.f32.mrf.mxu0
    %249 = vmatprep.mubr.f32.mxu0 0.0
    %250 = vmatmul.mubr.f32.gmra.mxu0 %v159
    %v251 = vpop.f32.mrf.mxu0
    %v252 = vadd.f32 0.0, %v251
    %v253 = vpop.f32.mrf.mxu0
    %254 = vdwg.mxu0
    %255 = vst [vmem:[#allocation9] sm:$0xff] %v247
    %256 = vst [vmem:[#allocation9 + $0x8] sm:$0xff] %v252
    // Predicated region
    $region30: #{tpu_custom_call.1} parent=1 // pred_check
      _
    $region31: #{tpu_custom_call.1} parent=1 // pred_check_branch
      %258 = sbr.rel (0) target = $region33
    $region32: #{tpu_custom_call.1} parent=1 // pred_region
      %s260 = ssub.s32 256, 256
      %261 = vsyncadd [#allocation4], %s260
      %s262 = sshll.u32 [#allocation8], 4
      %s263 = int_to_ptr.vmem [resolvable:$true] %s262
      %268 = dma.vmem_to_hbm [thread:$0]  %s263, 256, %s4, [#allocation4], 128, 128, 8
    $region33: #{tpu_custom_call.1} parent=1 // pred_fallthru
      _
    // Predicated region
    $region34: #{tpu_custom_call.1} parent=1 // pred_check
      _
    $region35: #{tpu_custom_call.1} parent=1 // pred_check_branch
      %270 = sbr.rel (0) target = $region37
    $region36: #{tpu_custom_call.1} parent=1 // pred_region
      %s272 = ssub.s32 256, 256
      %273 = vsyncadd [#allocation10], %s272
      %s274 = sshll.u32 [#allocation9], 4
      %s275 = int_to_ptr.vmem [resolvable:$true] %s274
      %280 = dma.vmem_to_hbm [thread:$0]  %s275, 256, %s5, [#allocation10], 128, 128, 8
    $region37: #{tpu_custom_call.1} parent=1 // pred_fallthru
      _
    // Predicated region
    $region38: #{tpu_custom_call.1} parent=1 // pred_check
      _
    $region39: #{tpu_custom_call.1} parent=1 // pred_check_branch
      %282 = sbr.rel (0) target = $region41
    $region40: #{tpu_custom_call.1} parent=1 // pred_region
      %283 = dma.done [#allocation4], 256
    $region41: #{tpu_custom_call.1} parent=1 // pred_fallthru
      _
    // Predicated region
    $region42: #{tpu_custom_call.1} parent=1 // pred_check
      _
    $region43: #{tpu_custom_call.1} parent=1 // pred_check_branch
      %285 = sbr.rel (0) target = $region45
    $region44: #{tpu_custom_call.1} parent=1 // pred_region
      %286 = dma.done [#allocation10], 256
    $region45: #{tpu_custom_call.1} parent=1 // pred_fallthru
      _
    %287 = vsyncpa [#allocation3], 1
    %288 = vsyncpa [#allocation6], 1
    %289 = vsyncpa [#allocation4], 1
    %290 = vsyncpa [#allocation10], 1

</llo_original>
